<compile_context>
chip_gen: v5e
topology: v5e:2x2
jax: 0.10.0
libtpu: 0.0.40
codegen_flags: <defaults>
</compile_context>

<pallas_src>
import functools

import jax
import jax.numpy as jnp
from jax.experimental import pallas as pl
from jax.experimental.pallas import tpu as pltpu

# ---- model sizes (small, consistent with the module) ----
VOCAB = 32        # inp_dim
EMBED = 16        # embed_dim
NUM_FILTERS = 32  # num_filters
OUT_DIM = 1       # output_dim (forward's squeeze(-1) implies 1)
KSIZE = 5         # Conv1d kernel size
BATCH = 2
SEQ = 16          # sequence length L (must be >= KSIZE)

# ---- packed-weight layout (all row offsets 8-sublane aligned) ----
KV = KSIZE * VOCAB        # 160 folded conv-tap rows: row k*V + v
MASK_COL = KV             # one-hot column hit by padded time rows
KVP = KV + 8              # matmul operand rows == one-hot width (168)
ROW_CB = KVP              # conv bias row          (168)
ROW_LW = KVP + 8          # linear weight row      (176)  [OUT_DIM == 1]
ROW_LB = KVP + 16         # linear bias row        (184)
PACK_ROWS = KVP + 24      # 192 total rows
NEG_BIG = -1e30           # finite "-inf": 0 * NEG_BIG == 0 inside the MXU


def _cnn_kernel(codes_ref, w_ref, out_ref, *, batch, t_pad):
    """Whole-batch forward pass, one grid point.

    codes_ref: (batch*t_pad, K) int32  codes[r,k] = ids[b, t+k] + k*V  (r = t*batch + b)
               padded time rows carry MASK_COL in every slot.
    w_ref    : (PACK_ROWS, F) f32      packed: folded taps / -1e30 pad row /
                                       conv bias / linear weight / linear bias.
    out_ref  : (batch, 1) f32          sigmoid(linear(relu(maxpool(conv(embed(ids))))))
    """
    rows = batch * t_pad

    # Shifted one-hot (gather + time shift folded into the MXU operand).
    codes = codes_ref[...]                                          # (rows, K)
    col = jax.lax.broadcasted_iota(jnp.int32, (rows, KVP), 1)
    hit = codes[:, 0:1] == col
    for k in range(1, KSIZE):
        hit = jnp.logical_or(hit, codes[:, k:k + 1] == col)
    onehot = hit.astype(jnp.float32)                                # (rows, KVP)

    # Single MXU contraction: valid rows get the full conv value (pre-bias),
    # padded rows get NEG_BIG via the dedicated pad row of w.
    conv = jnp.dot(onehot, w_ref[0:KVP, :],
                   preferred_element_type=jnp.float32)              # (rows, F)

    # Segmented global max over time for all batches at once.  Rows are
    # time-major (r = t*batch + b), so halving the leading dim halves time while
    # keeping batches separate; log2(t_pad) dense elementwise maxima, no selects.
    x = conv
    tt = t_pad
    while tt > 1:
        tt //= 2
        h = tt * batch
        x = jnp.maximum(x[:h, :], x[h:2 * h, :])
    pooled = x                                                      # (batch, F)

    conv_bias = w_ref[ROW_CB:ROW_CB + 1, :]                         # (1, F)
    lin_w = w_ref[ROW_LW:ROW_LW + 1, :]                             # (1, F)
    lin_b = w_ref[ROW_LB:ROW_LB + 1, 0:1]                           # (1, 1)

    # Bias hoisted after the max (exact), then ReLU as in the module.
    act = jnp.maximum(pooled + conv_bias, 0.0)                      # (batch, F)

    # Linear(F -> 1) as a lane reduce; single dense store of the whole batch.
    logit = jnp.sum(act * lin_w, axis=-1, keepdims=True) + lin_b    # (batch, 1)
    out_ref[...] = jax.nn.sigmoid(logit)


def prepare_params(emb_table, conv_w, conv_b, lin_w, lin_b):
    """One-time embedding/conv folding + packing into a single lane-dense buffer.

    Folding is exact: (onehot @ E) @ Wk == onehot @ (E @ Wk) since a one-hot row
    selects exactly one table row.  Hoisted out of the per-call forward path.
    """
    assert OUT_DIM == 1, "packed layout assumes output_dim == 1 (squeeze(-1) path)"
    # u[k*V + v, f] = sum_e emb[v, e] * conv_w[f, e, k]
    u = jnp.einsum("ve,fek->kvf", emb_table.astype(jnp.float32),
                   conv_w.astype(jnp.float32)).reshape(KV, NUM_FILTERS)

    packed = jnp.zeros((PACK_ROWS, NUM_FILTERS), jnp.float32)
    packed = packed.at[:KV, :].set(u)
    packed = packed.at[MASK_COL, :].set(NEG_BIG)              # pad-row sentinel
    packed = packed.at[ROW_CB, :].set(conv_b.reshape(-1).astype(jnp.float32))
    packed = packed.at[ROW_LW, :].set(lin_w.reshape(-1).astype(jnp.float32))
    packed = packed.at[ROW_LB, :].set(lin_b.reshape(-1)[0].astype(jnp.float32))
    return packed


@jax.jit
def cnn_forward(token_ids, w_packed):
    """token_ids: (B, L) int32.  Returns the same (B, 1) tensor as CNN.forward."""
    B, L = token_ids.shape
    T = L - KSIZE + 1
    assert T >= 1
    Tp = max(8, 1 << max(T - 1, 0).bit_length())      # power of 2, >= 8
    assert (Tp & (Tp - 1)) == 0 and Tp >= T
    pad_len = Tp + KSIZE - 1 - L                       # >= 0 by construction

    # Tiny per-call preprocessing: shifted ids -> codes (id + k*V), time-major.
    ids = token_ids.astype(jnp.int32)
    ids_pad = jnp.pad(ids, ((0, 0), (0, pad_len)))
    shifts = jnp.stack([ids_pad[:, k:k + Tp] for k in range(KSIZE)], axis=-1)   # (B,Tp,K)
    codes = shifts + (jnp.arange(KSIZE, dtype=jnp.int32) * VOCAB)[None, None, :]
    codes = jnp.where((jnp.arange(Tp) < T)[None, :, None], codes, MASK_COL)
    codes = jnp.transpose(codes, (1, 0, 2)).reshape(Tp * B, KSIZE).astype(jnp.int32)

    kernel = functools.partial(_cnn_kernel, batch=B, t_pad=Tp)
    out = pl.pallas_call(
        kernel,
        out_shape=jax.ShapeDtypeStruct((B, OUT_DIM), jnp.float32),
        # No grid: one invocation; two whole-array VMEM operands (ids codes +
        # one packed weight buffer) and one dense output store.
        # TODO(synk): add a "parallel" batch grid axis (v7x dual-TC) if B grows.
        in_specs=[pl.BlockSpec(memory_space=pltpu.MemorySpace.VMEM)] * 2,
        out_specs=pl.BlockSpec(memory_space=pltpu.MemorySpace.VMEM),
    )(codes, w_packed)
    return out


def init_params(key):
    """Deterministic synthetic parameters with PyTorch-default-like scales."""
    k_emb, k_cw, k_cb, k_lw, k_lb = jax.random.split(key, 5)
    emb_table = jax.random.normal(k_emb, (VOCAB, EMBED), jnp.float32)  # N(0,1)

    fan_in_conv = EMBED * KSIZE
    bound_c = 1.0 / jnp.sqrt(fan_in_conv)
    conv_w = jax.random.uniform(k_cw, (NUM_FILTERS, EMBED, KSIZE),
                                jnp.float32, -bound_c, bound_c)
    conv_b = jax.random.uniform(k_cb, (NUM_FILTERS,), jnp.float32,
                                -bound_c, bound_c)

    bound_l = 1.0 / jnp.sqrt(NUM_FILTERS)
    lin_w = jax.random.uniform(k_lw, (OUT_DIM, NUM_FILTERS),
                               jnp.float32, -bound_l, bound_l)
    lin_b = jax.random.uniform(k_lb, (OUT_DIM,), jnp.float32,
                               -bound_l, bound_l)
    return emb_table, conv_w, conv_b, lin_w, lin_b


if __name__ == "__main__":
    key = jax.random.PRNGKey(0)
    k_tok, k_par = jax.random.split(key)

    token_ids = jax.random.randint(k_tok, (BATCH, SEQ), 0, VOCAB, jnp.int32)
    raw_params = init_params(k_par)

    # One-time weight fold + pack (outside the per-call path).
    w_packed = prepare_params(*raw_params)

    out = cnn_forward(token_ids, w_packed)
    jax.block_until_ready(out)

    # Pure-JAX reference check (same math, no Pallas, unfused params).
    emb_table, conv_w, conv_b, lin_w, lin_b = raw_params
    emb = emb_table[token_ids]                                  # (B, L, E)
    T = SEQ - KSIZE + 1
    conv = jnp.zeros((BATCH, T, NUM_FILTERS), jnp.float32)
    for k in range(KSIZE):
        conv = conv + jnp.einsum("ble,fe->blf", emb[:, k:k + T, :],
                                 conv_w[:, :, k])
    conv = conv + conv_b[None, None, :]
    pooled = jnp.maximum(jnp.max(conv, axis=1, keepdims=True), 0.0)  # (B,1,F)
    ref = jax.nn.sigmoid(jnp.einsum("btf,of->bto", pooled, lin_w)
                         + lin_b[None, None, :])
    ref = ref[..., 0]                                           # (B, 1)
    assert out.shape == ref.shape == (BATCH, 1)
    assert jnp.allclose(out, ref, atol=1e-5, rtol=1e-5)

    print("KERNEL_OK")
</pallas_src>

<mosaic_0001>
module attributes {stable_mosaic.version = 11 : i64} {
  func.func @_cnn_kernel(%arg0: memref<32x5xi32, #tpu.memory_space<vmem>>, %arg1: memref<192x32xf32, #tpu.memory_space<vmem>>, %arg2: memref<2x1xf32, #tpu.memory_space<vmem>>) attributes {dimension_semantics = [], scalar_prefetch = 0 : i64, scratch_operands = 0 : i64, tpu.core_type = #tpu.core_type<tc>} {
    %c0 = arith.constant 0 : index
    %c0_0 = arith.constant 0 : index
    %0 = vector.load %arg0[%c0, %c0_0] : memref<32x5xi32, #tpu.memory_space<vmem>>, vector<32x5xi32>
    %1 = tpu.iota {dimensions = array<i32: 1>} : vector<32x168xi32>
    %2 = vector.extract_strided_slice %0 {offsets = [0, 0], sizes = [32, 1], strides = [1, 1]} : vector<32x5xi32> to vector<32x1xi32>
    %3 = vector.broadcast %2 : vector<32x1xi32> to vector<32x168xi32>
    %4 = arith.cmpi eq, %3, %1 : vector<32x168xi32>
    %5 = vector.extract_strided_slice %0 {offsets = [0, 1], sizes = [32, 1], strides = [1, 1]} : vector<32x5xi32> to vector<32x1xi32>
    %6 = vector.broadcast %5 : vector<32x1xi32> to vector<32x168xi32>
    %7 = arith.cmpi eq, %6, %1 : vector<32x168xi32>
    %8 = arith.ori %4, %7 : vector<32x168xi1>
    %9 = vector.extract_strided_slice %0 {offsets = [0, 2], sizes = [32, 1], strides = [1, 1]} : vector<32x5xi32> to vector<32x1xi32>
    %10 = vector.broadcast %9 : vector<32x1xi32> to vector<32x168xi32>
    %11 = arith.cmpi eq, %10, %1 : vector<32x168xi32>
    %12 = arith.ori %8, %11 : vector<32x168xi1>
    %13 = vector.extract_strided_slice %0 {offsets = [0, 3], sizes = [32, 1], strides = [1, 1]} : vector<32x5xi32> to vector<32x1xi32>
    %14 = vector.broadcast %13 : vector<32x1xi32> to vector<32x168xi32>
    %15 = arith.cmpi eq, %14, %1 : vector<32x168xi32>
    %16 = arith.ori %12, %15 : vector<32x168xi1>
    %17 = vector.extract_strided_slice %0 {offsets = [0, 4], sizes = [32, 1], strides = [1, 1]} : vector<32x5xi32> to vector<32x1xi32>
    %18 = vector.broadcast %17 : vector<32x1xi32> to vector<32x168xi32>
    %19 = arith.cmpi eq, %18, %1 : vector<32x168xi32>
    %20 = arith.ori %16, %19 : vector<32x168xi1>
    %21 = arith.extui %20 : vector<32x168xi1> to vector<32x168xi32>
    %22 = arith.sitofp %21 : vector<32x168xi32> to vector<32x168xf32>
    %c0_1 = arith.constant 0 : index
    %c0_2 = arith.constant 0 : index
    %23 = vector.load %arg1[%c0_1, %c0_2] : memref<192x32xf32, #tpu.memory_space<vmem>>, vector<168x32xf32>
    %cst = arith.constant dense<0.000000e+00> : vector<32x32xf32>
    %24 = tpu.matmul %22, %23, %cst {dimension_numbers = #tpu.dot_dimension_numbers<[1], [0], [0], [1], [0, 0, 1, 1], [], []>} : vector<32x168xf32>, vector<168x32xf32>, vector<32x32xf32> -> vector<32x32xf32>
    %25 = vector.extract_strided_slice %24 {offsets = [0, 0], sizes = [16, 32], strides = [1, 1]} : vector<32x32xf32> to vector<16x32xf32>
    %26 = vector.extract_strided_slice %24 {offsets = [16, 0], sizes = [16, 32], strides = [1, 1]} : vector<32x32xf32> to vector<16x32xf32>
    %27 = arith.maximumf %25, %26 : vector<16x32xf32>
    %28 = vector.extract_strided_slice %27 {offsets = [0, 0], sizes = [8, 32], strides = [1, 1]} : vector<16x32xf32> to vector<8x32xf32>
    %29 = vector.extract_strided_slice %27 {offsets = [8, 0], sizes = [8, 32], strides = [1, 1]} : vector<16x32xf32> to vector<8x32xf32>
    %30 = arith.maximumf %28, %29 : vector<8x32xf32>
    %31 = vector.extract_strided_slice %30 {offsets = [0, 0], sizes = [4, 32], strides = [1, 1]} : vector<8x32xf32> to vector<4x32xf32>
    %32 = vector.extract_strided_slice %30 {offsets = [4, 0], sizes = [4, 32], strides = [1, 1]} : vector<8x32xf32> to vector<4x32xf32>
    %33 = arith.maximumf %31, %32 : vector<4x32xf32>
    %34 = vector.extract_strided_slice %33 {offsets = [0, 0], sizes = [2, 32], strides = [1, 1]} : vector<4x32xf32> to vector<2x32xf32>
    %35 = vector.extract_strided_slice %33 {offsets = [2, 0], sizes = [2, 32], strides = [1, 1]} : vector<4x32xf32> to vector<2x32xf32>
    %36 = arith.maximumf %34, %35 : vector<2x32xf32>
    %c168 = arith.constant 168 : index
    %c0_3 = arith.constant 0 : index
    %37 = vector.load %arg1[%c168, %c0_3] : memref<192x32xf32, #tpu.memory_space<vmem>>, vector<1x32xf32>
    %c176 = arith.constant 176 : index
    %c0_4 = arith.constant 0 : index
    %38 = vector.load %arg1[%c176, %c0_4] : memref<192x32xf32, #tpu.memory_space<vmem>>, vector<1x32xf32>
    %c184 = arith.constant 184 : index
    %c0_5 = arith.constant 0 : index
    %39 = vector.load %arg1[%c184, %c0_5] : memref<192x32xf32, #tpu.memory_space<vmem>>, vector<1x1xf32>
    %40 = vector.broadcast %37 : vector<1x32xf32> to vector<2x32xf32>
    %41 = arith.addf %36, %40 : vector<2x32xf32>
    %cst_6 = arith.constant 0.000000e+00 : f32
    %42 = vector.broadcast %cst_6 : f32 to vector<2x32xf32>
    %43 = arith.maximumf %41, %42 : vector<2x32xf32>
    %44 = vector.broadcast %38 : vector<1x32xf32> to vector<2x32xf32>
    %45 = arith.mulf %43, %44 : vector<2x32xf32>
    %cst_7 = arith.constant dense<0.000000e+00> : vector<2xf32>
    %46 = vector.multi_reduction <add>, %45, %cst_7 [1] : vector<2x32xf32> to vector<2xf32>
    %47 = vector.shape_cast %46 : vector<2xf32> to vector<2x1xf32>
    %48 = vector.broadcast %39 : vector<1x1xf32> to vector<2x1xf32>
    %49 = arith.addf %47, %48 : vector<2x1xf32>
    %50 = arith.negf %49 : vector<2x1xf32>
    %51 = math.exp %50 : vector<2x1xf32>
    %cst_8 = arith.constant 1.000000e+00 : f32
    %52 = vector.broadcast %cst_8 : f32 to vector<2x1xf32>
    %53 = arith.addf %52, %51 : vector<2x1xf32>
    %54 = arith.divf %52, %53 : vector<2x1xf32>
    %c0_9 = arith.constant 0 : index
    %c0_10 = arith.constant 0 : index
    %55 = vector.load %arg2[%c0_9, %c0_10] : memref<2x1xf32, #tpu.memory_space<vmem>>, vector<2x1xf32>
    tpu.vector_store %arg2[%c0_9, %c0_10], %54 {strides = array<i32>} : memref<2x1xf32, #tpu.memory_space<vmem>>, vector<2x1xf32>,
    return
  }
}

</mosaic_0001>

<llo_original>
// kernel: cnn_forward.1
$region0: #{cnn_forward.1}
  #allocation0 [shape = 'u32[]', space=smem, size = 0x4, offset = 0x4, fixed_abs, tag = 'smem constant byte address 0x4 - core index']
  #allocation1 [shape = 'u32[72,128]{1,0:T(1,128)}', space=vmem, size = 0x9000, scoped, tag = 'internal scratch']
  %s0 = inlined_call_operand.vmem [shape: s32[32,5], index: 0, kind: input, shape index: {}]
  %s1 = inlined_call_operand.vmem [shape: f32[192,32], index: 1, kind: input, shape index: {}]
  %s2 = inlined_call_operand.vmem [shape: f32[2,1], index: 2, kind: output, shape index: {}]
  %s3 = sld [smem:[#allocation0]]
  $region18: #{cnn_forward.1} parent=0
    _
  %s5 = ssub.s32 1, %s3
  %s6 = scalar_select 0, %s5, %s3
  // Predicated region
  $region2: #{cnn_forward.1} parent=0 // pred_check
    _
  $region3: #{cnn_forward.1} parent=0 // pred_check_branch
    %8 = sbr.rel (0) target = $region5
  $region4: #{cnn_forward.1} parent=0 // pred_region
    _
  $region5: #{cnn_forward.1} parent=0 // pred_fallthru
    _
  // Predicated region
  $region6: #{cnn_forward.1} parent=0 // pred_check
    _
  $region7: #{cnn_forward.1} parent=0 // pred_check_branch
    %10 = sbr.rel (0) target = $region9
  $region8: #{cnn_forward.1} parent=0 // pred_region
    _
  $region9: #{cnn_forward.1} parent=0 // pred_fallthru
    _
  %v11 = vld [vmem:[%s0] sm:$0xff]
  %v12 = vld [vmem:[%s0 + $0x8] sm:$0xff]
  %v13 = vld [vmem:[%s0 + $0x10] sm:$0xff]
  %v14 = vld [vmem:[%s0 + $0x18] sm:$0xff]
  %v15 = vlaneseq
  %v16 = vand.u32 %v15, 127
  %v17 = vadd.s32 %v16, 128
  %18 = vset.pattern.permute.xlu0 0
  %19 = vperm.xlu0 %18, %v11
  %v20 = vpop.permute.xlu0 %19
  %21 = vset.pattern.permute.xlu0 0
  %22 = vperm.xlu0 %21, %v12
  %v23 = vpop.permute.xlu0 %22
  %24 = vset.pattern.permute.xlu0 0
  %25 = vperm.xlu0 %24, %v13
  %v26 = vpop.permute.xlu0 %25
  %27 = vset.pattern.permute.xlu0 0
  %28 = vperm.xlu0 %27, %v14
  %v29 = vpop.permute.xlu0 %28
  %vm30 = vcmp.eq.s32.totalorder %v20, %v16
  %vm31 = vcmp.eq.s32.totalorder %v20, %v17
  %vm32 = vcmp.eq.s32.totalorder %v23, %v16
  %vm33 = vcmp.eq.s32.totalorder %v23, %v17
  %vm34 = vcmp.eq.s32.totalorder %v26, %v16
  %vm35 = vcmp.eq.s32.totalorder %v26, %v17
  %vm36 = vcmp.eq.s32.totalorder %v29, %v16
  %vm37 = vcmp.eq.s32.totalorder %v29, %v17
  %38 = vset.pattern.permute.xlu0 1
  %39 = vperm.xlu0 %38, %v11
  %v40 = vpop.permute.xlu0 %39
  %41 = vset.pattern.permute.xlu0 1
  %42 = vperm.xlu0 %41, %v12
  %v43 = vpop.permute.xlu0 %42
  %44 = vset.pattern.permute.xlu0 1
  %45 = vperm.xlu0 %44, %v13
  %v46 = vpop.permute.xlu0 %45
  %47 = vset.pattern.permute.xlu0 1
  %48 = vperm.xlu0 %47, %v14
  %v49 = vpop.permute.xlu0 %48
  %vm50 = vcmp.eq.s32.totalorder %v40, %v16
  %vm51 = vcmp.eq.s32.totalorder %v40, %v17
  %vm52 = vcmp.eq.s32.totalorder %v43, %v16
  %vm53 = vcmp.eq.s32.totalorder %v43, %v17
  %vm54 = vcmp.eq.s32.totalorder %v46, %v16
  %vm55 = vcmp.eq.s32.totalorder %v46, %v17
  %vm56 = vcmp.eq.s32.totalorder %v49, %v16
  %vm57 = vcmp.eq.s32.totalorder %v49, %v17
  %vm58 = vmor %vm30, %vm50
  %vm59 = vmor %vm31, %vm51
  %vm60 = vmor %vm32, %vm52
  %vm61 = vmor %vm33, %vm53
  %vm62 = vmor %vm34, %vm54
  %vm63 = vmor %vm35, %vm55
  %vm64 = vmor %vm36, %vm56
  %vm65 = vmor %vm37, %vm57
  %66 = vset.pattern.permute.xlu0 2
  %67 = vperm.xlu0 %66, %v11
  %v68 = vpop.permute.xlu0 %67
  %69 = vset.pattern.permute.xlu0 2
  %70 = vperm.xlu0 %69, %v12
  %v71 = vpop.permute.xlu0 %70
  %72 = vset.pattern.permute.xlu0 2
  %73 = vperm.xlu0 %72, %v13
  %v74 = vpop.permute.xlu0 %73
  %75 = vset.pattern.permute.xlu0 2
  %76 = vperm.xlu0 %75, %v14
  %v77 = vpop.permute.xlu0 %76
  %vm78 = vcmp.eq.s32.totalorder %v68, %v16
  %vm79 = vcmp.eq.s32.totalorder %v68, %v17
  %vm80 = vcmp.eq.s32.totalorder %v71, %v16
  %vm81 = vcmp.eq.s32.totalorder %v71, %v17
  %vm82 = vcmp.eq.s32.totalorder %v74, %v16
  %vm83 = vcmp.eq.s32.totalorder %v74, %v17
  %vm84 = vcmp.eq.s32.totalorder %v77, %v16
  %vm85 = vcmp.eq.s32.totalorder %v77, %v17
  %vm86 = vmor %vm58, %vm78
  %vm87 = vmor %vm59, %vm79
  %vm88 = vmor %vm60, %vm80
  %vm89 = vmor %vm61, %vm81
  %vm90 = vmor %vm62, %vm82
  %vm91 = vmor %vm63, %vm83
  %vm92 = vmor %vm64, %vm84
  %vm93 = vmor %vm65, %vm85
  %94 = vset.pattern.permute.xlu0 3
  %95 = vperm.xlu0 %94, %v11
  %v96 = vpop.permute.xlu0 %95
  %97 = vset.pattern.permute.xlu0 3
  %98 = vperm.xlu0 %97, %v12
  %v99 = vpop.permute.xlu0 %98
  %100 = vset.pattern.permute.xlu0 3
  %101 = vperm.xlu0 %100, %v13
  %v102 = vpop.permute.xlu0 %101
  %103 = vset.pattern.permute.xlu0 3
  %104 = vperm.xlu0 %103, %v14
  %v105 = vpop.permute.xlu0 %104
  %vm106 = vcmp.eq.s32.totalorder %v96, %v16
  %vm107 = vcmp.eq.s32.totalorder %v96, %v17
  %vm108 = vcmp.eq.s32.totalorder %v99, %v16
  %vm109 = vcmp.eq.s32.totalorder %v99, %v17
  %vm110 = vcmp.eq.s32.totalorder %v102, %v16
  %vm111 = vcmp.eq.s32.totalorder %v102, %v17
  %vm112 = vcmp.eq.s32.totalorder %v105, %v16
  %vm113 = vcmp.eq.s32.totalorder %v105, %v17
  %vm114 = vmor %vm86, %vm106
  %vm115 = vmor %vm87, %vm107
  %vm116 = vmor %vm88, %vm108
  %vm117 = vmor %vm89, %vm109
  %vm118 = vmor %vm90, %vm110
  %vm119 = vmor %vm91, %vm111
  %vm120 = vmor %vm92, %vm112
  %vm121 = vmor %vm93, %vm113
  %122 = vset.pattern.permute.xlu0 4
  %123 = vperm.xlu0 %122, %v11
  %v124 = vpop.permute.xlu0 %123
  %125 = vset.pattern.permute.xlu0 4
  %126 = vperm.xlu0 %125, %v12
  %v127 = vpop.permute.xlu0 %126
  %128 = vset.pattern.permute.xlu0 4
  %129 = vperm.xlu0 %128, %v13
  %v130 = vpop.permute.xlu0 %129
  %131 = vset.pattern.permute.xlu0 4
  %132 = vperm.xlu0 %131, %v14
  %v133 = vpop.permute.xlu0 %132
  %vm134 = vcmp.eq.s32.totalorder %v124, %v16
  %vm135 = vcmp.eq.s32.totalorder %v124, %v17
  %vm136 = vcmp.eq.s32.totalorder %v127, %v16
  %vm137 = vcmp.eq.s32.totalorder %v127, %v17
  %vm138 = vcmp.eq.s32.totalorder %v130, %v16
  %vm139 = vcmp.eq.s32.totalorder %v130, %v17
  %vm140 = vcmp.eq.s32.totalorder %v133, %v16
  %vm141 = vcmp.eq.s32.totalorder %v133, %v17
  %vm142 = vmor %vm114, %vm134
  %vm143 = vmor %vm115, %vm135
  %vm144 = vmor %vm116, %vm136
  %vm145 = vmor %vm117, %vm137
  %vm146 = vmor %vm118, %vm138
  %vm147 = vmor %vm119, %vm139
  %vm148 = vmor %vm120, %vm140
  %vm149 = vmor %vm121, %vm141
  %v150 = vsel %vm142, 1, 0
  %v151 = vsel %vm143, 1, 0
  %v152 = vsel %vm144, 1, 0
  %v153 = vsel %vm145, 1, 0
  %v154 = vsel %vm146, 1, 0
  %v155 = vsel %vm147, 1, 0
  %v156 = vsel %vm148, 1, 0
  %v157 = vsel %vm149, 1, 0
  %v158 = vcvt.s32.f32 %v150
  %v159 = vcvt.s32.f32 %v151
  %v160 = vcvt.s32.f32 %v152
  %v161 = vcvt.s32.f32 %v153
  %v162 = vcvt.s32.f32 %v154
  %v163 = vcvt.s32.f32 %v155
  %v164 = vcvt.s32.f32 %v156
  %v165 = vcvt.s32.f32 %v157
  %v166 = vld [vmem:[%s1] sm:$0xff]
  %v167 = vld [vmem:[%s1 + $0x8] sm:$0xff]
  %v168 = vld [vmem:[%s1 + $0x10] sm:$0xff]
  %v169 = vld [vmem:[%s1 + $0x18] sm:$0xff]
  %v170 = vld [vmem:[%s1 + $0x20] sm:$0xff]
  %v171 = vld [vmem:[%s1 + $0x28] sm:$0xff]
  %v172 = vld [vmem:[%s1 + $0x30] sm:$0xff]
  %v173 = vld [vmem:[%s1 + $0x38] sm:$0xff]
  %v174 = vld [vmem:[%s1 + $0x40] sm:$0xff]
  %v175 = vld [vmem:[%s1 + $0x48] sm:$0xff]
  %v176 = vld [vmem:[%s1 + $0x50] sm:$0xff]
  %v177 = vld [vmem:[%s1 + $0x58] sm:$0xff]
  %v178 = vld [vmem:[%s1 + $0x60] sm:$0xff]
  %v179 = vld [vmem:[%s1 + $0x68] sm:$0xff]
  %v180 = vld [vmem:[%s1 + $0x70] sm:$0xff]
  %v181 = vld [vmem:[%s1 + $0x78] sm:$0xff]
  %v182 = vld [vmem:[%s1 + $0x80] sm:$0xff]
  %v183 = vld [vmem:[%s1 + $0x88] sm:$0xff]
  %v184 = vld [vmem:[%s1 + $0x90] sm:$0xff]
  %v185 = vld [vmem:[%s1 + $0x98] sm:$0xff]
  %v186 = vld [vmem:[%s1 + $0xa0] sm:$0xff]
  %vm187 = vcmask 326656
  %v189 = vsel %vm187, %v159, 0
  %v192 = vsel %vm187, %v161, 0
  %v195 = vsel %vm187, %v163, 0
  %v198 = vsel %vm187, %v165, 0
  %200 = vmatpush.msra.mxu0 %v181
  %201 = vmatpush.msra.mxu0 %v180
  %202 = vmatpush.msra.mxu0 %v179
  %203 = vmatpush.msra.mxu0 %v178
  %204 = vmatpush.msra.mxu0 %v177
  %205 = vmatpush.msra.mxu0 %v176
  %206 = vmatpush.msra.mxu0 %v175
  %207 = vmatpush.msra.mxu0 %v174
  %208 = vmatpush.msra.mxu0 %v173
  %209 = vmatpush.msra.mxu0 %v172
  %210 = vmatpush.msra.mxu0 %v171
  %211 = vmatpush.msra.mxu0 %v170
  %212 = vmatpush.msra.mxu0 %v169
  %213 = vmatpush.msra.mxu0 %v168
  %214 = vmatpush.msra.mxu0 %v167
  %215 = vmatpush.msra.mxu0 %v166
  %216 = vmatmul.f32.gmra.mxu0 %v158
  %v217 = vpop.f32.mrf.mxu0
  %v218 = vadd.f32 0.0, %v217
  %219 = vmatmul.f32.gmra.mxu0 %v160
  %v220 = vpop.f32.mrf.mxu0
  %v221 = vadd.f32 0.0, %v220
  %222 = vmatmul.f32.gmra.mxu0 %v162
  %v223 = vpop.f32.mrf.mxu0
  %v224 = vadd.f32 0.0, %v223
  %225 = vmatmul.f32.gmra.mxu0 %v164
  %v226 = vpop.f32.mrf.mxu0
  %v227 = vadd.f32 0.0, %v226
  %228 = vdwg.mxu0
  %229 = vmatpush.msra.mxu0 0.0
  %230 = vmatpush.msra.mxu0 0.0
  %231 = vmatpush.msra.mxu0 0.0
  %232 = vmatpush.msra.mxu0 0.0
  %233 = vmatpush.msra.mxu0 0.0
  %234 = vmatpush.msra.mxu0 0.0
  %235 = vmatpush.msra.mxu0 0.0
  %236 = vmatpush.msra.mxu0 0.0
  %237 = vmatpush.msra.mxu0 0.0
  %238 = vmatpush.msra.mxu0 0.0
  %239 = vmatpush.msra.mxu0 0.0
  %240 = vmatpush.msra.mxu0 %v186
  %241 = vmatpush.msra.mxu0 %v185
  %242 = vmatpush.msra.mxu0 %v184
  %243 = vmatpush.msra.mxu0 %v183
  %244 = vmatpush.msra.mxu0 %v182
  %245 = vmatmul.f32.gmra.mxu0 %v189
  %v246 = vpop.f32.mrf.mxu0
  %v247 = vadd.f32 %v218, %v246
  %248 = vmatmul.f32.gmra.mxu0 %v192
  %v249 = vpop.f32.mrf.mxu0
  %v250 = vadd.f32 %v221, %v249
  %251 = vmatmul.f32.gmra.mxu0 %v195
  %v252 = vpop.f32.mrf.mxu0
  %v253 = vadd.f32 %v224, %v252
  %254 = vmatmul.f32.gmra.mxu0 %v198
  %v255 = vpop.f32.mrf.mxu0
  %v256 = vadd.f32 %v227, %v255
  %257 = vdwg.mxu0
  %v258 = vmax.f32 %v247, %v253
  %v259 = vmax.f32 %v250, %v256
  %v260 = vmax.f32 %v258, %v259
  %v262 = vrot.slane %v260, 4
  %v264 = vmax.f32 %v260, %v262
  %v266 = vrot.slane %v264, 2
  %v268 = vmax.f32 %v264, %v266
  %v269 = vld [vmem:[%s1 + $0xa8] sm:$0x1]
  %v270 = vld [vmem:[%s1 + $0xb0] sm:$0x1]
  %v271 = vld [vmem:[%s1 + $0xb8] sm:$0x1]
  %v272 = vperm.slane %v269, 0
  %v273 = vadd.f32 %v268, %v272
  %v274 = vmax.f32 %v273, 0.0
  %v275 = vperm.slane %v270, 0
  %v276 = vmul.f32 %v274, %v275
  %vm277 = vcmask 254976
  %v278 = vsel %vm277, %v276, 0.0
  %279 = vadd.xlane.f32.xlu0 %v278
  %v280 = vpop.xlane.xlu0 %279
  %v281 = vperm.slane %v271, 0
  %v282 = vadd.f32 %v280, %v281
  %v283 = vxor.u32 %v282, 2147483648
  %v284 = vmul.f32 %v283, 1.442695
  %v285 = vpow.pop %v284
  %v286 = vadd.f32 %v285, 1.0
  %v287 = vrcp.pop %v286
  %v288 = vmul.f32 %v286, %v287
  %v289 = vsub.f32 1.0, %v288
  %v290 = vmul.f32 %v287, %v289
  %v291 = vadd.f32 %v287, %v290
  %vm292 = vweird.f32 %v286
  %vm293 = vweird.f32 %v287
  %vm294 = vmor %vm292, %vm293
  %v295 = vsel %vm294, %v287, %v291
  %v296 = vand.u32 2147483647, %v286
  %vm297 = vcmp.eq.f32.partialorder %v296, 8.507059e+37
  %v298 = vand.u32 %v286, 2147483648
  %v299 = vor.u32 1.1754944e-38, %v298
  %v300 = vsel %vm297, %v299, %v295
  %v301 = vmul.f32 1.0, %v300
  %vm302 = vcmask 1024
  %303 = vst.msk [vmem:[%s2] sm:$0x3] %vm302, %v301
  // Predicated region
  $region10: #{cnn_forward.1} parent=0 // pred_check
    _
  $region11: #{cnn_forward.1} parent=0 // pred_check_branch
    %305 = sbr.rel (0) target = $region13
  $region12: #{cnn_forward.1} parent=0 // pred_region
    _
  $region13: #{cnn_forward.1} parent=0 // pred_fallthru
    _
  // Predicated region
  $region14: #{cnn_forward.1} parent=0 // pred_check
    _
  $region15: #{cnn_forward.1} parent=0 // pred_check_branch
    %307 = sbr.rel (0) target = $region17
  $region16: #{cnn_forward.1} parent=0 // pred_region
    _
  $region17: #{cnn_forward.1} parent=0 // pred_fallthru
    _

</llo_original>
